<compile_context>
chip_gen: v5e
topology: v5e:2x2
jax: 0.10.0
libtpu: 0.0.40
codegen_flags: <defaults>
</compile_context>

<pallas_src>
import functools

import jax
import jax.numpy as jnp
import numpy as np
from jax.experimental import pallas as pl
from jax.experimental.pallas import tpu as pltpu


# ---------------------------------------------------------------------------
# Kernel
# ---------------------------------------------------------------------------
def self_attention_kernel(n_valid, use_bf16_exp,
                          gamma_ref,            # SMEM (1, 1)        f32
                          qt_ref,               # VMEM (1, Np, C8)   bf16 (per batch)
                          v_ref,                # VMEM (1, C,  Np)   bf16 (per batch)
                          xcol_ref,             # VMEM (1, C,  Tn)   f32  (column tile)
                          wk_ref,               # VMEM (C8, C)       bf16
                          bk_ref,               # VMEM (C8, 1)       f32
                          o_ref):               # VMEM (1, C,  Tn)   f32
    x_tile = xcol_ref[0]                                              # (C, Tn) f32

    # k projection for this column tile: bf16 operands, f32 accumulation.
    k_tile = jnp.dot(wk_ref[...], x_tile.astype(jnp.bfloat16),
                     preferred_element_type=jnp.float32) + bk_ref[...]  # (C8, Tn)

    # Scores s[i, j] = sum_c q[c, i] * k[c, j]  -> (Np, Tn), f32 accumulation.
    s = jnp.dot(qt_ref[0], k_tile.astype(jnp.bfloat16),
                preferred_element_type=jnp.float32)

    # Mask padded rows (positions >= n_valid) so they drop out of the softmax.
    if s.shape[0] != n_valid:
        row = jax.lax.broadcasted_iota(jnp.int32, s.shape, 0)
        s = jnp.where(row < n_valid, s, -jnp.inf)

    # Column-wise softmax over rows (nn.Softmax(dim=-2)); columns independent,
    # so no online-softmax rescaling is needed.
    m = jnp.max(s, axis=0, keepdims=True)                             # (1, Tn)
    z = s - m
    if use_bf16_exp:
        e = jnp.exp(z.astype(jnp.bfloat16))                           # bf16 EUP (v6e/v7x)
    else:
        e = jnp.exp(z)                                                # f32 (v5e-safe)
    denom = jnp.sum(e.astype(jnp.float32), axis=0, keepdims=True)     # (1, Tn), >= 1

    # Deferred normalization: scale the small (C, Tn) result, not the (Np, Tn) e.
    o_un = jnp.dot(v_ref[0], e.astype(jnp.bfloat16),
                   preferred_element_type=jnp.float32)                # (C, Tn)
    o = o_un * pl.reciprocal(denom, approx=True)

    o_ref[0] = (x_tile + gamma_ref[0, 0] * o).astype(o_ref.dtype)


# ---------------------------------------------------------------------------
# Generation-aware configuration helpers
# ---------------------------------------------------------------------------
def _tpu_generation():
    try:
        kind = jax.devices()[0].device_kind.lower()
    except Exception:
        return 6
    for g in (7, 6, 5, 4, 3, 2):
        if f"v{g}" in kind:
            return g
    return 6


def _vmem_capacity_bytes(gen):
    try:
        cap = int(pltpu.get_tpu_info().vmem_capacity_bytes)
        if cap > 0:
            return cap
    except Exception:
        pass
    return (64 << 20) if gen >= 7 else (128 << 20)


def _pick_column_tile(n_pad, tn_max):
    for cand in (tn_max, 256, 128):
        if cand <= n_pad and n_pad % cand == 0:
            return cand
    return n_pad


# ---------------------------------------------------------------------------
# Wrapper
# ---------------------------------------------------------------------------
def self_attention(x_nchw, wq, bq, wk, bk, wv, bv, gamma,
                   *, tn_max=None, vmem_limit_bytes=None, use_bf16_exp=None):
    B, C, H, W = x_nchw.shape
    N = H * W
    C8 = wq.shape[0]

    gen = _tpu_generation()
    vmem_cap = _vmem_capacity_bytes(gen)
    if use_bf16_exp is None:
        use_bf16_exp = gen >= 6                     # v5e and older: no bf16 EUP
    if vmem_limit_bytes is None:
        # ~96 MiB on v5e/v6e (128 MiB physical), ~48 MiB on v7x (64 MiB physical).
        vmem_limit_bytes = min(96 << 20, max(32 << 20, (vmem_cap * 3) // 4), vmem_cap)
    if tn_max is None:
        tn_max = 512 if (gen >= 6 and vmem_cap > (64 << 20)) else 256

    # Pad N up to a multiple of 128 so output stores are lane-dense/unmasked.
    n_pad = ((N + 127) // 128) * 128
    tn = _pick_column_tile(n_pad, tn_max)
    n_j = n_pad // tn

    x_flat = x_nchw.reshape(B, C, N).astype(jnp.float32)              # (B, C, N)
    if n_pad != N:
        x_flat = jnp.pad(x_flat, ((0, 0), (0, 0), (0, n_pad - N)))

    # Hoisted 1x1-conv projections (plain XLA bf16 GEMMs, once per call):
    #   q^T = x^T Wq^T + bq -> (B, Np, C8)   ;   v = Wv x + bv -> (B, C, Np)
    x_b = x_flat.astype(jnp.bfloat16)
    qt = (jnp.einsum("oc,bcn->bno", wq.astype(jnp.bfloat16), x_b,
                     preferred_element_type=jnp.float32)
          + bq.astype(jnp.float32)[None, None, :]).astype(jnp.bfloat16)
    v = (jnp.einsum("oc,bcn->bon", wv.astype(jnp.bfloat16), x_b,
                    preferred_element_type=jnp.float32)
         + bv.astype(jnp.float32)[None, :, None]).astype(jnp.bfloat16)

    gamma2d = jnp.asarray(gamma, jnp.float32).reshape(1, 1)
    wk_b = wk.astype(jnp.bfloat16)
    bk2 = bk.reshape(C8, 1).astype(jnp.float32)

    kernel = functools.partial(self_attention_kernel, N, use_bf16_exp)

    out_flat = pl.pallas_call(
        kernel,
        out_shape=jax.ShapeDtypeStruct((B, C, n_pad), jnp.float32),
        grid=(B, n_j),
        in_specs=[
            pl.BlockSpec(memory_space=pltpu.MemorySpace.SMEM),         # gamma
            pl.BlockSpec((1, n_pad, C8), lambda b, j: (b, 0, 0)),      # q^T (per batch)
            pl.BlockSpec((1, C, n_pad), lambda b, j: (b, 0, 0)),       # v   (per batch)
            pl.BlockSpec((1, C, tn), lambda b, j: (b, 0, j)),          # x column tile
            pl.BlockSpec((C8, C), lambda b, j: (0, 0)),                # Wk (bf16)
            pl.BlockSpec((C8, 1), lambda b, j: (0, 0)),                # bk
        ],
        out_specs=pl.BlockSpec((1, C, tn), lambda b, j: (b, 0, j)),
        compiler_params=pltpu.CompilerParams(
            dimension_semantics=("parallel", "parallel"),
            vmem_limit_bytes=int(vmem_limit_bytes)),
    )(gamma2d, qt, v, x_flat, wk_b, bk2)

    return out_flat[:, :, :N].reshape(B, C, H, W)


# ---------------------------------------------------------------------------
# Pure-JAX reference (matches the PyTorch forward exactly)
# ---------------------------------------------------------------------------
def self_attention_ref(x_nchw, wq, bq, wk, bk, wv, bv, gamma):
    B, C, H, W = x_nchw.shape
    N = H * W
    x = x_nchw.reshape(B, C, N)
    q = jnp.einsum("oc,bcn->bon", wq, x) + bq[None, :, None]   # (B, C8, N)
    k = jnp.einsum("oc,bcn->bon", wk, x) + bk[None, :, None]   # (B, C8, N)
    v = jnp.einsum("oc,bcn->bon", wv, x) + bv[None, :, None]   # (B, C,  N)
    s = jnp.einsum("bci,bcj->bij", q, k)                       # (B, N, N)
    attn = jax.nn.softmax(s, axis=-2)
    o = jnp.einsum("bci,bij->bcj", v, attn)                    # (B, C, N)
    out = x + gamma * o
    return out.reshape(B, C, H, W)


# ---------------------------------------------------------------------------
# Test harness
# ---------------------------------------------------------------------------
def _run_case(key, B, C, H, W, **kwargs):
    C8 = max(C // 8, 1)
    kx, kq, kbq, kk, kbk, kv, kbv = jax.random.split(key, 7)
    x = jax.random.normal(kx, (B, C, H, W), jnp.float32)
    wq = jax.random.normal(kq, (C8, C), jnp.float32) * 0.1
    bq = jax.random.normal(kbq, (C8,), jnp.float32) * 0.1
    wk = jax.random.normal(kk, (C8, C), jnp.float32) * 0.1
    bk = jax.random.normal(kbk, (C8,), jnp.float32) * 0.1
    wv = jax.random.normal(kv, (C, C), jnp.float32) * 0.1
    bv = jax.random.normal(kbv, (C,), jnp.float32) * 0.1
    # The module __init__ sets gamma = 0 (output would reduce to x); use a
    # nonzero value so the attention path is actually exercised / verified.
    gamma = jnp.float32(0.5)

    out = jax.block_until_ready(
        self_attention(x, wq, bq, wk, bk, wv, bv, gamma, **kwargs))
    ref = jax.block_until_ready(
        self_attention_ref(x, wq, bq, wk, bk, wv, bv, gamma))
    # bf16 MXU operands + bf16 exp (on v6e/v7x) + approx reciprocal vs. an f32
    # reference -> relaxed tolerance.
    np.testing.assert_allclose(np.asarray(out), np.asarray(ref),
                               rtol=3e-2, atol=3e-2)


if __name__ == "__main__":
    key = jax.random.PRNGKey(0)
    k1, k2, k3 = jax.random.split(key, 3)

    # Case 1: N = 64 (< 128) -> padded to 128; exercises the row-mask path.
    _run_case(k1, B=2, C=16, H=8, W=8)

    # Case 2: N = 256, lane-aligned (no padding needed).
    _run_case(k2, B=2, C=16, H=16, W=16)

    # Case 3: N = 1024 -> multiple column tiles on every generation
    # (tn = 512 on v6e, 256 on v5e/v7x); exercises per-batch q^T / v residency
    # across column tiles with both grid axes parallel.
    _run_case(k3, B=1, C=32, H=32, W=32)

    print("KERNEL_OK")
</pallas_src>

<mosaic_0001>
module attributes {stable_mosaic.version = 11 : i64} {
  func.func @self_attention_kernel(%arg0: i32, %arg1: i32, %arg2: memref<1x1xf32, #tpu.memory_space<smem>>, %arg3: memref<1x128x2xbf16, #tpu.memory_space<vmem>>, %arg4: memref<1x16x128xbf16, #tpu.memory_space<vmem>>, %arg5: memref<1x16x128xf32, #tpu.memory_space<vmem>>, %arg6: memref<2x16xbf16, #tpu.memory_space<vmem>>, %arg7: memref<2x1xf32, #tpu.memory_space<vmem>>, %arg8: memref<1x16x128xf32, #tpu.memory_space<vmem>>) attributes {dimension_semantics = [#tpu.dimension_semantics<parallel>, #tpu.dimension_semantics<parallel>], iteration_bounds = array<i64: 2, 1>, scalar_prefetch = 0 : i64, scratch_operands = 0 : i64, tpu.core_type = #tpu.core_type<tc>, window_params = [{transform_indices = @transform_0, window_bounds = array<i64: 1, 1>}, {transform_indices = @transform_1, window_bounds = array<i64: 1, 128, 2>}, {transform_indices = @transform_2, window_bounds = array<i64: 1, 16, 128>}, {transform_indices = @transform_3, window_bounds = array<i64: 1, 16, 128>}, {pipeline_mode = #tpu.pipeline_mode<synchronous>, transform_indices = @transform_4, window_bounds = array<i64: 2, 16>}, {pipeline_mode = #tpu.pipeline_mode<synchronous>, transform_indices = @transform_5, window_bounds = array<i64: 2, 1>}, {transform_indices = @transform_6, window_bounds = array<i64: 1, 16, 128>}]} {
    %c0 = arith.constant 0 : index
    %c0_0 = arith.constant 0 : index
    %c0_1 = arith.constant 0 : index
    %0 = vector.load %arg5[%c0, %c0_0, %c0_1] : memref<1x16x128xf32, #tpu.memory_space<vmem>>, vector<1x16x128xf32>
    %1 = vector.shape_cast %0 : vector<1x16x128xf32> to vector<16x128xf32>
    %c0_2 = arith.constant 0 : index
    %c0_3 = arith.constant 0 : index
    %2 = vector.load %arg6[%c0_2, %c0_3] : memref<2x16xbf16, #tpu.memory_space<vmem>>, vector<2x16xbf16>
    %3 = arith.truncf %1 : vector<16x128xf32> to vector<16x128xbf16>
    %cst = arith.constant dense<0.000000e+00> : vector<2x128xf32>
    %4 = tpu.matmul %2, %3, %cst {dimension_numbers = #tpu.dot_dimension_numbers<[1], [0], [0], [1], [0, 0, 1, 1], [], []>} : vector<2x16xbf16>, vector<16x128xbf16>, vector<2x128xf32> -> vector<2x128xf32>
    %c0_4 = arith.constant 0 : index
    %c0_5 = arith.constant 0 : index
    %5 = vector.load %arg7[%c0_4, %c0_5] : memref<2x1xf32, #tpu.memory_space<vmem>>, vector<2x1xf32>
    %6 = vector.broadcast %5 : vector<2x1xf32> to vector<2x128xf32>
    %7 = arith.addf %4, %6 : vector<2x128xf32>
    %c0_6 = arith.constant 0 : index
    %c0_7 = arith.constant 0 : index
    %c0_8 = arith.constant 0 : index
    %8 = vector.load %arg3[%c0_6, %c0_7, %c0_8] : memref<1x128x2xbf16, #tpu.memory_space<vmem>>, vector<1x128x2xbf16>
    %9 = vector.shape_cast %8 : vector<1x128x2xbf16> to vector<128x2xbf16>
    %10 = arith.truncf %7 : vector<2x128xf32> to vector<2x128xbf16>
    %cst_9 = arith.constant dense<0.000000e+00> : vector<128x128xf32>
    %11 = tpu.matmul %9, %10, %cst_9 {dimension_numbers = #tpu.dot_dimension_numbers<[1], [0], [0], [1], [0, 0, 1, 1], [], []>} : vector<128x2xbf16>, vector<2x128xbf16>, vector<128x128xf32> -> vector<128x128xf32>
    %12 = tpu.iota {dimensions = array<i32: 0>} : vector<128x128xi32>
    %c64_i32 = arith.constant 64 : i32
    %13 = vector.broadcast %c64_i32 : i32 to vector<128x128xi32>
    %14 = arith.cmpi slt, %12, %13 : vector<128x128xi32>
    %cst_10 = arith.constant 0xFF800000 : f32
    %15 = vector.broadcast %cst_10 : f32 to vector<128x128xf32>
    %16 = arith.select %14, %11, %15 : vector<128x128xi1>, vector<128x128xf32>
    %cst_11 = arith.constant dense<0xFF800000> : vector<128xf32>
    %17 = vector.multi_reduction <maximumf>, %16, %cst_11 [0] : vector<128x128xf32> to vector<128xf32>
    %18 = vector.shape_cast %17 : vector<128xf32> to vector<1x128xf32>
    %19 = vector.broadcast %18 : vector<1x128xf32> to vector<128x128xf32>
    %20 = arith.subf %16, %19 : vector<128x128xf32>
    %21 = arith.truncf %20 : vector<128x128xf32> to vector<128x128xbf16>
    %22 = math.exp %21 : vector<128x128xbf16>
    %23 = arith.extf %22 : vector<128x128xbf16> to vector<128x128xf32>
    %cst_12 = arith.constant dense<0.000000e+00> : vector<128xf32>
    %24 = vector.multi_reduction <add>, %23, %cst_12 [0] : vector<128x128xf32> to vector<128xf32>
    %25 = vector.shape_cast %24 : vector<128xf32> to vector<1x128xf32>
    %c0_13 = arith.constant 0 : index
    %c0_14 = arith.constant 0 : index
    %c0_15 = arith.constant 0 : index
    %26 = vector.load %arg4[%c0_13, %c0_14, %c0_15] : memref<1x16x128xbf16, #tpu.memory_space<vmem>>, vector<1x16x128xbf16>
    %27 = vector.shape_cast %26 : vector<1x16x128xbf16> to vector<16x128xbf16>
    %cst_16 = arith.constant dense<0.000000e+00> : vector<16x128xf32>
    %28 = tpu.matmul %27, %22, %cst_16 {dimension_numbers = #tpu.dot_dimension_numbers<[1], [0], [0], [1], [0, 0, 1, 1], [], []>} : vector<16x128xbf16>, vector<128x128xbf16>, vector<16x128xf32> -> vector<16x128xf32>
    %29 = tpu.reciprocal %25 {approx = true} : vector<1x128xf32> -> vector<1x128xf32>
    %30 = vector.broadcast %29 : vector<1x128xf32> to vector<16x128xf32>
    %31 = arith.mulf %28, %30 : vector<16x128xf32>
    %c0_17 = arith.constant 0 : index
    %c0_18 = arith.constant 0 : index
    %32 = memref.load %arg2[%c0_17, %c0_18] : memref<1x1xf32, #tpu.memory_space<smem>>
    %33 = vector.broadcast %32 : f32 to vector<16x128xf32>
    %34 = arith.mulf %33, %31 : vector<16x128xf32>
    %35 = arith.addf %1, %34 : vector<16x128xf32>
    %c0_19 = arith.constant 0 : index
    %c0_20 = arith.constant 0 : index
    %c0_21 = arith.constant 0 : index
    %36 = vector.load %arg8[%c0_19, %c0_20, %c0_21] : memref<1x16x128xf32, #tpu.memory_space<vmem>>, vector<1x16x128xf32>
    %37 = vector.shape_cast %36 : vector<1x16x128xf32> to vector<16x128xf32>
    %38 = vector.shape_cast %35 : vector<16x128xf32> to vector<1x16x128xf32>
    tpu.vector_store %arg8[%c0_19, %c0_20, %c0_21], %38 {strides = array<i32>} : memref<1x16x128xf32, #tpu.memory_space<vmem>>, vector<1x16x128xf32>,
    return
  }
  func.func @transform_0(%arg0: i32, %arg1: i32) -> (i32, i32) {
    %c0_i32 = arith.constant 0 : i32
    %c0_i32_0 = arith.constant 0 : i32
    %c0_i32_1 = arith.constant 0 : i32
    return %c0_i32, %c0_i32_0 : i32, i32
  }
  func.func @transform_1(%arg0: i32, %arg1: i32) -> (i32, i32, i32) {
    %c0_i32 = arith.constant 0 : i32
    %c0_i32_0 = arith.constant 0 : i32
    %c0_i32_1 = arith.constant 0 : i32
    return %arg0, %c0_i32, %c0_i32_0 : i32, i32, i32
  }
  func.func @transform_2(%arg0: i32, %arg1: i32) -> (i32, i32, i32) {
    %c0_i32 = arith.constant 0 : i32
    %c0_i32_0 = arith.constant 0 : i32
    %c0_i32_1 = arith.constant 0 : i32
    return %arg0, %c0_i32, %c0_i32_0 : i32, i32, i32
  }
  func.func @transform_3(%arg0: i32, %arg1: i32) -> (i32, i32, i32) {
    %c0_i32 = arith.constant 0 : i32
    %c0_i32_0 = arith.constant 0 : i32
    return %arg0, %c0_i32, %arg1 : i32, i32, i32
  }
  func.func @transform_4(%arg0: i32, %arg1: i32) -> (i32, i32) {
    %c0_i32 = arith.constant 0 : i32
    %c0_i32_0 = arith.constant 0 : i32
    %c0_i32_1 = arith.constant 0 : i32
    return %c0_i32, %c0_i32_0 : i32, i32
  }
  func.func @transform_5(%arg0: i32, %arg1: i32) -> (i32, i32) {
    %c0_i32 = arith.constant 0 : i32
    %c0_i32_0 = arith.constant 0 : i32
    %c0_i32_1 = arith.constant 0 : i32
    return %c0_i32, %c0_i32_0 : i32, i32
  }
  func.func @transform_6(%arg0: i32, %arg1: i32) -> (i32, i32, i32) {
    %c0_i32 = arith.constant 0 : i32
    %c0_i32_0 = arith.constant 0 : i32
    return %arg0, %c0_i32, %arg1 : i32, i32, i32
  }
}

</mosaic_0001>

<llo_original>
// kernel: tpu_custom_call.1
$region0: #{tpu_custom_call.1}
  #allocation0 [shape = 'u32[]', space=smem, size = 0x4, offset = 0x4, fixed_abs, tag = 'smem constant byte address 0x4 - core index']
  #allocation1 [shape = 'u32[72,128]{1,0:T(1,128)}', space=vmem, size = 0x9000, scoped, tag = 'internal scratch']
  #allocation2 [shape = 'f32[1,1]{1,0:T(1,128)S(6)}', space=smem, size = 0x200, scoped, tag = 'scoped memory for tpu_custom_call.1']
  %s0 = inlined_call_operand.<no memory space> [shape: f32[1,1], index: 0, kind: input, shape index: {}]
  %s1 = inlined_call_operand.vmem [shape: bf16[2,128,2], index: 1, kind: input, shape index: {}]
  %s2 = inlined_call_operand.vmem [shape: bf16[2,16,128], index: 2, kind: input, shape index: {}]
  %s3 = inlined_call_operand.vmem [shape: f32[2,16,128], index: 3, kind: input, shape index: {}]
  %s4 = inlined_call_operand.vmem [shape: bf16[2,16], index: 4, kind: input, shape index: {}]
  %s5 = inlined_call_operand.vmem [shape: f32[2,1], index: 5, kind: input, shape index: {}]
  %s6 = inlined_call_operand.hbm [shape: f32[2,16,128], index: 6, kind: output, shape index: {}]
  %s7 = sld [smem:[#allocation0]]
  $region57: #{tpu_custom_call.1} parent=0
    _
  %s9 = ssub.s32 1, %s7
  %s10 = scalar_select 0, %s9, %s7
  %11 = sst [smem:[#allocation2]] %s0
  $region1: #{tpu_custom_call.1} parent=0
    #allocation3 [shape = 'u8[16384]{0}', space=vmem, size = 0x4000, scoped, tag = 'output window, operand 0']
    #allocation4 [shape = 's32[2]{0}', space=sflag, size = 0x8, scoped, tag = 'scoped memory for tpu_custom_call.1']
    %12 = vsyncpa [#allocation4], 0
    %s13 = scalar_lea.sflag [#allocation4], 1
    %14 = vsyncpa %s13, 0
    loop: start=0, step=1, limit=4
    $region2: #{tpu_custom_call.1} parent=1 // loop_pre_header
      _
    $region3: #{tpu_custom_call.1} parent=1 // loop_header
      %s16 = sphi 0, %s20
      %p17 = scmp.ge.s32.totalorder %s16, 4
      %s23 = sphi 0, %s35
      %s24 = sphi 0, %s31
      %s25 = sphi 0, %s23
      %s26 = sphi 0, %s24
      %s27 = sphi 0, %s25
      %s28 = sphi 0, %s26
      %s36 = sphi 0, %s36
      %s38 = sphi 0, %s36
      %s39 = sphi 0, %s38
      %s53 = sphi 0, %s39
      %s59 = sphi 0, %s61
      %s62 = sphi 0, %s59
      %s63 = sphi 0, %s62
      %s79 = sphi 0, %s63
      %s85 = sphi 0, %s87
      %s88 = sphi 0, %s85
      %s89 = sphi 0, %s88
      %s105 = sphi 0, %s89
      %s113 = sphi 0, %s115
      %s116 = sphi 0, %s113
      %s117 = sphi 0, %s116
      %s133 = sphi 0, %s117
      %s137 = sphi 0, %s137
      %s139 = sphi 0, %s137
      %s140 = sphi 0, %s139
      %s154 = sphi 0, %s140
      %s158 = sphi 0, %s158
      %s160 = sphi 0, %s158
      %s161 = sphi 0, %s160
      %s175 = sphi 0, %s161
      %s183 = sphi 0, %s185
      %s186 = sphi 0, %s183
      %s187 = sphi 0, %s186
      %s203 = sphi 0, %s187
    $region4: #{tpu_custom_call.1} parent=1 // loop_header_branch
      %19 = sbr.rel (%p17) target = $region8
    $region5: #{tpu_custom_call.1} parent=1 // loop_body
      %s21 = ssub.s32 %s16, 1
      %s22 = ssub.s32 %s16, 2
      %s29 = sadd.s32 1, %s24
      %p30 = scmp.ge.s32.totalorder %s29, 1
      %s31 = scalar_select %p30, 0, %s29
      %s32 = sadd.s32 1, %s23
      %s33 = scalar_select %p30, %s32, %s23
      %p34 = scmp.ge.s32.totalorder %s33, 2
      %s35 = scalar_select %p34, 0, %s33
      %s37 = sadd.s32 %s36, 1
      %p40 = scmp.eq.s32.totalorder %s16, 1
      %p41 = scmp.ne.s32.totalorder %s36, %s38
      %p42 = scmp.eq.s32.totalorder %s16, 0
      %p43 = por %p41, %p42
      %p44 = scmp.ne.s32.totalorder %s36, %s38
      %p45 = scmp.eq.s32.totalorder %s21, 1
      %p46 = por %p44, %p45
      %p47 = scmp.ne.s32.totalorder %s38, %s39
      %p48 = scmp.eq.s32.totalorder %s21, 0
      %p49 = por %p47, %p48
      %p50 = scmp.ne.s32.totalorder %s38, %s39
      %p51 = scmp.eq.s32.totalorder %s22, 1
      %p52 = por %p50, %p51
      %p54 = scmp.ne.s32.totalorder %s39, %s53
      %p55 = scmp.eq.s32.totalorder %s22, 0
      %p56 = por %p54, %p55
      %s57 = ssub.s32 %s23, %s35
      %p58 = scmp.eq.s32.totalorder %s57, 0
      %s60 = sadd.s32 %s59, 1
      %s61 = scalar_select %p58, %s59, %s60
      %p64 = pneg %p58
      %p65 = scmp.eq.s32.totalorder %s16, 1
      %p66 = por %p64, %p65
      %p67 = scmp.ne.s32.totalorder %s59, %s62
      %p68 = scmp.eq.s32.totalorder %s16, 0
      %p69 = por %p67, %p68
      %p70 = scmp.ne.s32.totalorder %s59, %s62
      %p71 = scmp.eq.s32.totalorder %s21, 1
      %p72 = por %p70, %p71
      %p73 = scmp.ne.s32.totalorder %s62, %s63
      %p74 = scmp.eq.s32.totalorder %s21, 0
      %p75 = por %p73, %p74
      %p76 = scmp.ne.s32.totalorder %s62, %s63
      %p77 = scmp.eq.s32.totalorder %s22, 1
      %p78 = por %p76, %p77
      %p80 = scmp.ne.s32.totalorder %s63, %s79
      %p81 = scmp.eq.s32.totalorder %s22, 0
      %p82 = por %p80, %p81
      %s83 = ssub.s32 %s23, %s35
      %p84 = scmp.eq.s32.totalorder %s83, 0
      %s86 = sadd.s32 %s85, 1
      %s87 = scalar_select %p84, %s85, %s86
      %p90 = pneg %p84
      %p91 = scmp.eq.s32.totalorder %s16, 1
      %p92 = por %p90, %p91
      %p93 = scmp.ne.s32.totalorder %s85, %s88
      %p94 = scmp.eq.s32.totalorder %s16, 0
      %p95 = por %p93, %p94
      %p96 = scmp.ne.s32.totalorder %s85, %s88
      %p97 = scmp.eq.s32.totalorder %s21, 1
      %p98 = por %p96, %p97
      %p99 = scmp.ne.s32.totalorder %s88, %s89
      %p100 = scmp.eq.s32.totalorder %s21, 0
      %p101 = por %p99, %p100
      %p102 = scmp.ne.s32.totalorder %s88, %s89
      %p103 = scmp.eq.s32.totalorder %s22, 1
      %p104 = por %p102, %p103
      %p106 = scmp.ne.s32.totalorder %s89, %s105
      %p107 = scmp.eq.s32.totalorder %s22, 0
      %p108 = por %p106, %p107
      %s109 = ssub.s32 %s23, %s35
      %s110 = ssub.s32 %s24, %s31
      %s111 = sor.u32 %s109, %s110
      %p112 = scmp.eq.s32.totalorder %s111, 0
      %s114 = sadd.s32 %s113, 1
      %s115 = scalar_select %p112, %s113, %s114
      %p118 = pneg %p112
      %p119 = scmp.eq.s32.totalorder %s16, 1
      %p120 = por %p118, %p119
      %p121 = scmp.ne.s32.totalorder %s113, %s116
      %p122 = scmp.eq.s32.totalorder %s16, 0
      %p123 = por %p121, %p122
      %p124 = scmp.ne.s32.totalorder %s113, %s116
      %p125 = scmp.eq.s32.totalorder %s21, 1
      %p126 = por %p124, %p125
      %p127 = scmp.ne.s32.totalorder %s116, %s117
      %p128 = scmp.eq.s32.totalorder %s21, 0
      %p129 = por %p127, %p128
      %p130 = scmp.ne.s32.totalorder %s116, %s117
      %p131 = scmp.eq.s32.totalorder %s22, 1
      %p132 = por %p130, %p131
      %p134 = scmp.ne.s32.totalorder %s117, %s133
      %p135 = scmp.eq.s32.totalorder %s22, 0
      %p136 = por %p134, %p135
      %s138 = sadd.s32 %s137, 1
      %p141 = scmp.eq.s32.totalorder %s16, 1
      %p142 = scmp.ne.s32.totalorder %s137, %s139
      %p143 = scmp.eq.s32.totalorder %s16, 0
      %p144 = por %p142, %p143
      %p145 = scmp.ne.s32.totalorder %s137, %s139
      %p146 = scmp.eq.s32.totalorder %s21, 1
      %p147 = por %p145, %p146
      %p148 = scmp.ne.s32.totalorder %s139, %s140
      %p149 = scmp.eq.s32.totalorder %s21, 0
      %p150 = por %p148, %p149
      %p151 = scmp.ne.s32.totalorder %s139, %s140
      %p152 = scmp.eq.s32.totalorder %s22, 1
      %p153 = por %p151, %p152
      %p155 = scmp.ne.s32.totalorder %s140, %s154
      %p156 = scmp.eq.s32.totalorder %s22, 0
      %p157 = por %p155, %p156
      %s159 = sadd.s32 %s158, 1
      %p162 = scmp.eq.s32.totalorder %s16, 1
      %p163 = scmp.ne.s32.totalorder %s158, %s160
      %p164 = scmp.eq.s32.totalorder %s16, 0
      %p165 = por %p163, %p164
      %p166 = scmp.ne.s32.totalorder %s158, %s160
      %p167 = scmp.eq.s32.totalorder %s21, 1
      %p168 = por %p166, %p167
      %p169 = scmp.ne.s32.totalorder %s160, %s161
      %p170 = scmp.eq.s32.totalorder %s21, 0
      %p171 = por %p169, %p170
      %p172 = scmp.ne.s32.totalorder %s160, %s161
      %p173 = scmp.eq.s32.totalorder %s22, 1
      %p174 = por %p172, %p173
      %p176 = scmp.ne.s32.totalorder %s161, %s175
      %p177 = scmp.eq.s32.totalorder %s22, 0
      %p178 = por %p176, %p177
      %s179 = ssub.s32 %s23, %s35
      %s180 = ssub.s32 %s24, %s31
      %s181 = sor.u32 %s179, %s180
      %p182 = scmp.eq.s32.totalorder %s181, 0
      %s184 = sadd.s32 %s183, 1
      %s185 = scalar_select %p182, %s183, %s184
      %p188 = pneg %p182
      %p189 = scmp.eq.s32.totalorder %s16, 1
      %p190 = por %p188, %p189
      %p191 = scmp.ne.s32.totalorder %s183, %s186
      %p192 = scmp.eq.s32.totalorder %s16, 0
      %p193 = por %p191, %p192
      %p194 = scmp.ne.s32.totalorder %s183, %s186
      %p195 = scmp.eq.s32.totalorder %s21, 1
      %p196 = por %p194, %p195
      %p197 = scmp.ne.s32.totalorder %s186, %s187
      %p198 = scmp.eq.s32.totalorder %s21, 0
      %p199 = por %p197, %p198
      %p200 = scmp.ne.s32.totalorder %s186, %s187
      %p201 = scmp.eq.s32.totalorder %s22, 1
      %p202 = por %p200, %p201
      %p204 = scmp.ne.s32.totalorder %s187, %s203
      %p205 = scmp.eq.s32.totalorder %s22, 0
      %p206 = por %p204, %p205
      %p207 = scmp.le.s32.totalorder 1, %s16
      %p208 = scmp.lt.s32.totalorder %s16, 3
      %p209 = pnand %p207, %p208
      %p210 = pneg %p209
      // Predicated region
      $region9: #{tpu_custom_call.1} parent=5 // pred_check
        _
      $region10: #{tpu_custom_call.1} parent=5 // pred_check_branch
        %212 = sbr.rel (%p209) target = $region12
      $region11: #{tpu_custom_call.1} parent=5 // pred_region
        %s213 = ssub.s32 %s16, 1
        // Predicated region
        $region13: #{tpu_custom_call.1} parent=11 // pred_check
          %p214 = pneg %p49
        $region14: #{tpu_custom_call.1} parent=11 // pred_check_branch
          %216 = sbr.rel (%p214) target = $region16
        $region15: #{tpu_custom_call.1} parent=11 // pred_region
          _
        $region16: #{tpu_custom_call.1} parent=11 // pred_fallthru
          _
        // Predicated region
        $region17: #{tpu_custom_call.1} parent=11 // pred_check
          %p217 = pneg %p150
        $region18: #{tpu_custom_call.1} parent=11 // pred_check_branch
          %219 = sbr.rel (%p217) target = $region20
        $region19: #{tpu_custom_call.1} parent=11 // pred_region
          _
        $region20: #{tpu_custom_call.1} parent=11 // pred_fallthru
          _
        // Predicated region
        $region21: #{tpu_custom_call.1} parent=11 // pred_check
          %p220 = pneg %p171
        $region22: #{tpu_custom_call.1} parent=11 // pred_check_branch
          %222 = sbr.rel (%p220) target = $region24
        $region23: #{tpu_custom_call.1} parent=11 // pred_region
          _
        $region24: #{tpu_custom_call.1} parent=11 // pred_fallthru
          _
      $region12: #{tpu_custom_call.1} parent=5 // pred_fallthru
        _
      %p223 = scmp.lt.s32.totalorder %s16, 2
      // Predicated region
      $region25: #{tpu_custom_call.1} parent=5 // pred_check
        %p224 = pneg %p223
      $region26: #{tpu_custom_call.1} parent=5 // pred_check_branch
        %226 = sbr.rel (%p224) target = $region28
      $region27: #{tpu_custom_call.1} parent=5 // pred_region
        // Predicated region
        $region29: #{tpu_custom_call.1} parent=27 // pred_check
          %p227 = pneg %p69
        $region30: #{tpu_custom_call.1} parent=27 // pred_check_branch
          %229 = sbr.rel (%p227) target = $region32
        $region31: #{tpu_custom_call.1} parent=27 // pred_region
          %p230 = scmp.lt.s32.totalorder %s23, 1
          %s231 = scalar_select %p230, %s23, 1
          %s232 = smul.addr %s231, 16
          %s233 = smul.addr %s232, 4
          %s234 = scalar_lea.vmem %s1, %s233
        $region32: #{tpu_custom_call.1} parent=27 // pred_fallthru
          _
        // Predicated region
        $region33: #{tpu_custom_call.1} parent=27 // pred_check
          %p235 = pneg %p95
        $region34: #{tpu_custom_call.1} parent=27 // pred_check_branch
          %237 = sbr.rel (%p235) target = $region36
        $region35: #{tpu_custom_call.1} parent=27 // pred_region
          %p238 = scmp.lt.s32.totalorder %s23, 1
          %s239 = scalar_select %p238, %s23, 1
          %s240 = smul.addr %s239, 2
          %s241 = smul.addr %s240, 4
          %s242 = scalar_lea.vmem %s2, %s241
        $region36: #{tpu_custom_call.1} parent=27 // pred_fallthru
          _
        // Predicated region
        $region37: #{tpu_custom_call.1} parent=27 // pred_check
          %p243 = pneg %p123
        $region38: #{tpu_custom_call.1} parent=27 // pred_check_branch
          %245 = sbr.rel (%p243) target = $region40
        $region39: #{tpu_custom_call.1} parent=27 // pred_region
          %p246 = scmp.lt.s32.totalorder %s23, 1
          %s247 = scalar_select %p246, %s23, 1
          %p248 = scmp.lt.s32.totalorder %s24, 0
          %s249 = scalar_select %p248, %s24, 0
          %s250 = smul.addr %s247, 2
          %s251 = sadd.s32 %s249, %s250
          %s252 = smul.addr %s251, 8
          %s253 = scalar_lea.vmem %s3, %s252
        $region40: #{tpu_custom_call.1} parent=27 // pred_fallthru
          _
      $region28: #{tpu_custom_call.1} parent=5 // pred_fallthru
        _
      %p254 = scmp.le.s32.totalorder 1, %s16
      %p255 = scmp.lt.s32.totalorder %s16, 3
      %p256 = pnand %p254, %p255
      %p257 = pneg %p256
      // Predicated region
      $region41: #{tpu_custom_call.1} parent=5 // pred_check
        _
      $region42: #{tpu_custom_call.1} parent=5 // pred_check_branch
        %259 = sbr.rel (%p256) target = $region44
      $region43: #{tpu_custom_call.1} parent=5 // pred_region
        %s260 = ssub.s32 %s16, 1
        %p261 = pneg %p49
        %p262 = pneg %p46
        %p263 = scmp.lt.s32.totalorder %s25, 1
        %s264 = scalar_select %p263, %s25, 1
        %s265 = smul.addr %s264, 16
        %s266 = smul.addr %s265, 4
        %s267 = scalar_lea.vmem %s1, %s266
        %p268 = pneg %p75
        %p269 = pneg %p72
        %p270 = scmp.lt.s32.totalorder %s25, 1
        %s271 = scalar_select %p270, %s25, 1
        %s272 = smul.addr %s271, 2
        %s273 = smul.addr %s272, 4
        %s274 = scalar_lea.vmem %s2, %s273
        %p275 = pneg %p101
        %p276 = pneg %p98
        %p277 = scmp.lt.s32.totalorder %s25, 1
        %s278 = scalar_select %p277, %s25, 1
        %p279 = scmp.lt.s32.totalorder %s26, 0
        %s280 = scalar_select %p279, %s26, 0
        %s281 = smul.addr %s278, 2
        %s282 = sadd.s32 %s280, %s281
        %s283 = smul.addr %s282, 8
        %s284 = scalar_lea.vmem %s3, %s283
        %p285 = pneg %p129
        %p286 = pneg %p126
        %p287 = pneg %p150
        %p288 = pneg %p147
        %p289 = pneg %p171
        %p290 = pneg %p168
        %p291 = pneg %p199
        %p292 = pneg %p196
        %s293 = sand.u32 %s186, 1
        %s294 = scalar_lea.sflag [#allocation4], %s293
        %s295 = sand.u32 %s186, 1
        %s296 = smul.addr %s295, 16
        %s297 = scalar_lea.vmem [#allocation3], %s296
        %p298 = scmp.lt.s32.totalorder %s25, 1
        %s299 = scalar_select %p298, %s25, 1
        %s300 = smul.addr %s299, 16
        %s301 = smul.addr %s300, 4
        %s302 = scalar_lea.vmem %s1, %s301
        %p303 = scmp.lt.s32.totalorder %s25, 1
        %s304 = scalar_select %p303, %s25, 1
        %s305 = smul.addr %s304, 2
        %s306 = smul.addr %s305, 4
        %s307 = scalar_lea.vmem %s2, %s306
        %p308 = scmp.lt.s32.totalorder %s25, 1
        %s309 = scalar_select %p308, %s25, 1
        %p310 = scmp.lt.s32.totalorder %s26, 0
        %s311 = scalar_select %p310, %s26, 0
        %s312 = smul.addr %s309, 2
        %s313 = sadd.s32 %s311, %s312
        %s314 = smul.addr %s313, 8
        %s315 = scalar_lea.vmem %s3, %s314
        %v317 = vld [vmem:[%s315] sm:$0xff]
        %v318 = vld [vmem:[%s315 + $0x8] sm:$0xff]
        %v319 = vld [vmem:[%s4] sm:$0x1]
        %v320 = vpack.c.bf16 %v318, %v317
        %v321 = vld [vmem:[%s5] sm:$0x3]
        %323 = vset.pattern.permute.xlu0 0
        %324 = vperm.xlu0 %323, %v321
        %v325 = vpop.permute.xlu0 %324
        %vm327 = vcmask 130048
        %v329 = vsel %vm327, %v319, 0
        %331 = vmatpush.bf16.msra.mxu0 0
        %332 = vmatpush.bf16.msra.mxu0 0
        %333 = vmatpush.bf16.msra.mxu0 0
        %334 = vmatpush.bf16.msra.mxu0 0
        %335 = vmatpush.bf16.msra.mxu0 0
        %336 = vmatpush.bf16.msra.mxu0 0
        %337 = vmatpush.bf16.msra.mxu0 0
        %338 = vmatpush.bf16.msra.mxu0 %v320
        %339 = vmatmul.bf16.gmra.mxu0 %v329
        %v340 = vpop.f32.mrf.mxu0
        %v341 = vadd.f32 %v325, %v340
        %v342 = vpop.f32.mrf.mxu0
        %343 = vdwg.mxu0
        %v344 = vld [vmem:[%s302] sm:$0xf]
        %v345 = vld [vmem:[%s302 + $0x4] sm:$0xf]
        %v346 = vld [vmem:[%s302 + $0x8] sm:$0xf]
        %v347 = vld [vmem:[%s302 + $0xc] sm:$0xf]
        %v348 = vld [vmem:[%s302 + $0x10] sm:$0xf]
        %v349 = vld [vmem:[%s302 + $0x14] sm:$0xf]
        %v350 = vld [vmem:[%s302 + $0x18] sm:$0xf]
        %v351 = vld [vmem:[%s302 + $0x1c] sm:$0xf]
        %v352 = vld [vmem:[%s302 + $0x20] sm:$0xf]
        %v353 = vld [vmem:[%s302 + $0x24] sm:$0xf]
        %v354 = vld [vmem:[%s302 + $0x28] sm:$0xf]
        %v355 = vld [vmem:[%s302 + $0x2c] sm:$0xf]
        %v356 = vld [vmem:[%s302 + $0x30] sm:$0xf]
        %v357 = vld [vmem:[%s302 + $0x34] sm:$0xf]
        %v358 = vld [vmem:[%s302 + $0x38] sm:$0xf]
        %v359 = vld [vmem:[%s302 + $0x3c] sm:$0xf]
        %v360 = vpack.c.bf16 %v341, %v341
        %v377 = vunpack.c.l.b16 %v344
        %v378 = vunpack.c.l.b16 %v345
        %v379 = vunpack.c.l.b16 %v346
        %v380 = vunpack.c.l.b16 %v347
        %v381 = vunpack.c.l.b16 %v348
        %v382 = vunpack.c.l.b16 %v349
        %v383 = vunpack.c.l.b16 %v350
        %v384 = vunpack.c.l.b16 %v351
        %v385 = vunpack.c.l.b16 %v352
        %v386 = vunpack.c.l.b16 %v353
        %v387 = vunpack.c.l.b16 %v354
        %v388 = vunpack.c.l.b16 %v355
        %v389 = vunpack.c.l.b16 %v356
        %v390 = vunpack.c.l.b16 %v357
        %v391 = vunpack.c.l.b16 %v358
        %v392 = vunpack.c.l.b16 %v359
        %v393 = vpack.c.b16 %v378, %v377
        %v394 = vpack.c.b16 %v380, %v379
        %v395 = vpack.c.b16 %v382, %v381
        %v396 = vpack.c.b16 %v384, %v383
        %v397 = vpack.c.b16 %v386, %v385
        %v398 = vpack.c.b16 %v388, %v387
        %v399 = vpack.c.b16 %v390, %v389
        %v400 = vpack.c.b16 %v392, %v391
        %vm401 = vcmask 15360
        %v403 = vsel %vm401, %v393, 0
        %v406 = vsel %vm401, %v394, 0
        %v409 = vsel %vm401, %v395, 0
        %v412 = vsel %vm401, %v396, 0
        %v415 = vsel %vm401, %v397, 0
        %v418 = vsel %vm401, %v398, 0
        %v421 = vsel %vm401, %v399, 0
        %v424 = vsel %vm401, %v400, 0
        %vm426 = vcmask 1040384
        %v428 = vsel %vm426, %v360, 0
        %430 = vmatpush.bf16.msra.mxu0 0
        %431 = vmatpush.bf16.msra.mxu0 0
        %432 = vmatpush.bf16.msra.mxu0 0
        %433 = vmatpush.bf16.msra.mxu0 0
        %434 = vmatpush.bf16.msra.mxu0 0
        %435 = vmatpush.bf16.msra.mxu0 0
        %436 = vmatpush.bf16.msra.mxu0 0
        %437 = vmatpush.bf16.msra.mxu0 %v428
        %438 = vmatmul.bf16.gmra.mxu0 %v403
        %v439 = vpop.f32.mrf.mxu0
        %v440 = vadd.f32 0.0, %v439
        %v441 = vpop.f32.mrf.mxu0
        %v442 = vadd.f32 0.0, %v441
        %443 = vmatmul.bf16.gmra.mxu0 %v406
        %v444 = vpop.f32.mrf.mxu0
        %v445 = vadd.f32 0.0, %v444
        %v446 = vpop.f32.mrf.mxu0
        %v447 = vadd.f32 0.0, %v446
        %448 = vmatmul.bf16.gmra.mxu0 %v409
        %v449 = vpop.f32.mrf.mxu0
        %v450 = vadd.f32 0.0, %v449
        %v451 = vpop.f32.mrf.mxu0
        %v452 = vadd.f32 0.0, %v451
        %453 = vmatmul.bf16.gmra.mxu0 %v412
        %v454 = vpop.f32.mrf.mxu0
        %v455 = vadd.f32 0.0, %v454
        %v456 = vpop.f32.mrf.mxu0
        %v457 = vadd.f32 0.0, %v456
        %458 = vmatmul.bf16.gmra.mxu0 %v415
        %v459 = vpop.f32.mrf.mxu0
        %v460 = vadd.f32 0.0, %v459
        %v461 = vpop.f32.mrf.mxu0
        %v462 = vadd.f32 0.0, %v461
        %463 = vmatmul.bf16.gmra.mxu0 %v418
        %v464 = vpop.f32.mrf.mxu0
        %v465 = vadd.f32 0.0, %v464
        %v466 = vpop.f32.mrf.mxu0
        %v467 = vadd.f32 0.0, %v466
        %468 = vmatmul.bf16.gmra.mxu0 %v421
        %v469 = vpop.f32.mrf.mxu0
        %v470 = vadd.f32 0.0, %v469
        %v471 = vpop.f32.mrf.mxu0
        %v472 = vadd.f32 0.0, %v471
        %473 = vmatmul.bf16.gmra.mxu0 %v424
        %v474 = vpop.f32.mrf.mxu0
        %v475 = vadd.f32 0.0, %v474
        %v476 = vpop.f32.mrf.mxu0
        %v477 = vadd.f32 0.0, %v476
        %478 = vdwg.mxu0
        %v479 = vlaneseq
        %v480 = vshrl.u32 %v479, 7
        %v481 = vadd.s32 %v480, 8
        %v482 = vadd.s32 %v480, 16
        %v483 = vadd.s32 %v480, 24
        %v484 = vadd.s32 %v480, 32
        %v485 = vadd.s32 %v480, 40
        %v486 = vadd.s32 %v480, 48
        %v487 = vadd.s32 %v480, 56
        %v488 = vadd.s32 %v480, 64
        %v489 = vadd.s32 %v480, 72
        %v490 = vadd.s32 %v480, 80
        %v491 = vadd.s32 %v480, 88
        %v492 = vadd.s32 %v480, 96
        %v493 = vadd.s32 %v480, 104
        %v494 = vadd.s32 %v480, 112
        %v495 = vadd.s32 %v480, 120
        %vm496 = vcmp.lt.s32.totalorder %v480, 64
        %vm497 = vcmp.lt.s32.totalorder %v481, 64
        %vm498 = vcmp.lt.s32.totalorder %v482, 64
        %vm499 = vcmp.lt.s32.totalorder %v483, 64
        %vm500 = vcmp.lt.s32.totalorder %v484, 64
        %vm501 = vcmp.lt.s32.totalorder %v485, 64
        %vm502 = vcmp.lt.s32.totalorder %v486, 64
        %vm503 = vcmp.lt.s32.totalorder %v487, 64
        %vm504 = vcmp.lt.s32.totalorder %v488, 64
        %vm505 = vcmp.lt.s32.totalorder %v489, 64
        %vm506 = vcmp.lt.s32.totalorder %v490, 64
        %vm507 = vcmp.lt.s32.totalorder %v491, 64
        %vm508 = vcmp.lt.s32.totalorder %v492, 64
        %vm509 = vcmp.lt.s32.totalorder %v493, 64
        %vm510 = vcmp.lt.s32.totalorder %v494, 64
        %vm511 = vcmp.lt.s32.totalorder %v495, 64
        %v512 = vsel %vm496, %v440, -inf
        %v513 = vsel %vm497, %v442, -inf
        %v514 = vsel %vm498, %v445, -inf
        %v515 = vsel %vm499, %v447, -inf
        %v516 = vsel %vm500, %v450, -inf
        %v517 = vsel %vm501, %v452, -inf
        %v518 = vsel %vm502, %v455, -inf
        %v519 = vsel %vm503, %v457, -inf
        %v520 = vsel %vm504, %v460, -inf
        %v521 = vsel %vm505, %v462, -inf
        %v522 = vsel %vm506, %v465, -inf
        %v523 = vsel %vm507, %v467, -inf
        %v524 = vsel %vm508, %v470, -inf
        %v525 = vsel %vm509, %v472, -inf
        %v526 = vsel %vm510, %v475, -inf
        %v527 = vsel %vm511, %v477, -inf
        %v528 = vmax.f32 %v512, %v516
        %v529 = vmax.f32 %v513, %v517
        %v530 = vmax.f32 %v514, %v518
        %v531 = vmax.f32 %v515, %v519
        %v532 = vmax.f32 %v528, %v520
        %v533 = vmax.f32 %v529, %v521
        %v534 = vmax.f32 %v530, %v522
        %v535 = vmax.f32 %v531, %v523
        %v536 = vmax.f32 %v532, %v524
        %v537 = vmax.f32 %v533, %v525
        %v538 = vmax.f32 %v534, %v526
        %v539 = vmax.f32 %v535, %v527
        %v540 = vmax.f32 %v536, %v537
        %v541 = vmax.f32 %v538, %v539
        %v542 = vmax.f32 %v540, %v541
        %v543 = vrot.slane %v542, 4
        %v544 = vmax.f32 %v542, %v543
        %v545 = vrot.slane %v544, 2
        %v546 = vmax.f32 %v544, %v545
        %v547 = vrot.slane %v546, 1
        %v548 = vmax.f32 %v546, %v547
        %v549 = vsub.f32 %v512, %v548
        %v550 = vsub.f32 %v513, %v548
        %v551 = vsub.f32 %v514, %v548
        %v552 = vsub.f32 %v515, %v548
        %v553 = vsub.f32 %v516, %v548
        %v554 = vsub.f32 %v517, %v548
        %v555 = vsub.f32 %v518, %v548
        %v556 = vsub.f32 %v519, %v548
        %v557 = vsub.f32 %v520, %v548
        %v558 = vsub.f32 %v521, %v548
        %v559 = vsub.f32 %v522, %v548
        %v560 = vsub.f32 %v523, %v548
        %v561 = vsub.f32 %v524, %v548
        %v562 = vsub.f32 %v525, %v548
        %v563 = vsub.f32 %v526, %v548
        %v564 = vsub.f32 %v527, %v548
        %v565 = vpack.c.bf16 %v550, %v549
        %v566 = vpack.c.bf16 %v552, %v551
        %v567 = vpack.c.bf16 %v554, %v553
        %v568 = vpack.c.bf16 %v556, %v555
        %v569 = vpack.c.bf16 %v558, %v557
        %v570 = vpack.c.bf16 %v560, %v559
        %v571 = vpack.c.bf16 %v562, %v561
        %v572 = vpack.c.bf16 %v564, %v563
        %v573 = vunpack.c.l.bf16 %v565
        %v574 = vunpack.c.h.bf16 %v565
        %v575 = vunpack.c.l.bf16 %v566
        %v576 = vunpack.c.h.bf16 %v566
        %v577 = vunpack.c.l.bf16 %v567
        %v578 = vunpack.c.h.bf16 %v567
        %v579 = vunpack.c.l.bf16 %v568
        %v580 = vunpack.c.h.bf16 %v568
        %v581 = vunpack.c.l.bf16 %v569
        %v582 = vunpack.c.h.bf16 %v569
        %v583 = vunpack.c.l.bf16 %v570
        %v584 = vunpack.c.h.bf16 %v570
        %v585 = vunpack.c.l.bf16 %v571
        %v586 = vunpack.c.h.bf16 %v571
        %v587 = vunpack.c.l.bf16 %v572
        %v588 = vunpack.c.h.bf16 %v572
        %v589 = vmul.f32 %v573, 1.442695
        %v590 = vpow.pop %v589
        %v591 = vmul.f32 %v574, 1.442695
        %v592 = vpow.pop %v591
        %v593 = vmul.f32 %v575, 1.442695
        %v594 = vpow.pop %v593
        %v595 = vmul.f32 %v576, 1.442695
        %v596 = vpow.pop %v595
        %v597 = vmul.f32 %v577, 1.442695
        %v598 = vpow.pop %v597
        %v599 = vmul.f32 %v578, 1.442695
        %v600 = vpow.pop %v599
        %v601 = vmul.f32 %v579, 1.442695
        %v602 = vpow.pop %v601
        %v603 = vmul.f32 %v580, 1.442695
        %v604 = vpow.pop %v603
        %v605 = vmul.f32 %v581, 1.442695
        %v606 = vpow.pop %v605
        %v607 = vmul.f32 %v582, 1.442695
        %v608 = vpow.pop %v607
        %v609 = vmul.f32 %v583, 1.442695
        %v610 = vpow.pop %v609
        %v611 = vmul.f32 %v584, 1.442695
        %v612 = vpow.pop %v611
        %v613 = vmul.f32 %v585, 1.442695
        %v614 = vpow.pop %v613
        %v615 = vmul.f32 %v586, 1.442695
        %v616 = vpow.pop %v615
        %v617 = vmul.f32 %v587, 1.442695
        %v618 = vpow.pop %v617
        %v619 = vmul.f32 %v588, 1.442695
        %v620 = vpow.pop %v619
        %v621 = vpack.c.bf16 %v592, %v590
        %v622 = vpack.c.bf16 %v596, %v594
        %v623 = vpack.c.bf16 %v600, %v598
        %v624 = vpack.c.bf16 %v604, %v602
        %v625 = vpack.c.bf16 %v608, %v606
        %v626 = vpack.c.bf16 %v612, %v610
        %v627 = vpack.c.bf16 %v616, %v614
        %v628 = vpack.c.bf16 %v620, %v618
        %v629 = vunpack.c.l.bf16 %v621
        %v630 = vunpack.c.h.bf16 %v621
        %v631 = vunpack.c.l.bf16 %v622
        %v632 = vunpack.c.h.bf16 %v622
        %v633 = vunpack.c.l.bf16 %v623
        %v634 = vunpack.c.h.bf16 %v623
        %v635 = vunpack.c.l.bf16 %v624
        %v636 = vunpack.c.h.bf16 %v624
        %v637 = vunpack.c.l.bf16 %v625
        %v638 = vunpack.c.h.bf16 %v625
        %v639 = vunpack.c.l.bf16 %v626
        %v640 = vunpack.c.h.bf16 %v626
        %v641 = vunpack.c.l.bf16 %v627
        %v642 = vunpack.c.h.bf16 %v627
        %v643 = vunpack.c.l.bf16 %v628
        %v644 = vunpack.c.h.bf16 %v628
        %v645 = vadd.f32 %v629, %v630
        %v646 = vadd.f32 %v645, %v631
        %v647 = vadd.f32 %v646, %v632
        %v648 = vadd.f32 %v647, %v633
        %v649 = vadd.f32 %v648, %v634
        %v650 = vadd.f32 %v649, %v635
        %v651 = vadd.f32 %v650, %v636
        %v652 = vadd.f32 %v651, %v637
        %v653 = vadd.f32 %v652, %v638
        %v654 = vadd.f32 %v653, %v639
        %v655 = vadd.f32 %v654, %v640
        %v656 = vadd.f32 %v655, %v641
        %v657 = vadd.f32 %v656, %v642
        %v658 = vadd.f32 %v657, %v643
        %v659 = vadd.f32 %v658, %v644
        %v660 = vrot.slane %v659, 4
        %v661 = vadd.f32 %v659, %v660
        %v662 = vrot.slane %v661, 2
        %v663 = vadd.f32 %v661, %v662
        %v664 = vrot.slane %v663, 1
        %v665 = vadd.f32 %v663, %v664
        %v666 = vld [vmem:[%s307] sm:$0xf]
        %v667 = vld [vmem:[%s307 + $0x4] sm:$0xf]
        %v670 = vunpack.c.l.b16 %v666
        %v671 = vunpack.c.l.b16 %v667
        %v672 = vpack.c.b16 %v671, %v670
        %674 = vmatpush.bf16.msra.mxu0 %v628
        %675 = vmatpush.bf16.msra.mxu0 %v627
        %676 = vmatpush.bf16.msra.mxu0 %v626
        %677 = vmatpush.bf16.msra.mxu0 %v625
        %678 = vmatpush.bf16.msra.mxu0 %v624
        %679 = vmatpush.bf16.msra.mxu0 %v623
        %680 = vmatpush.bf16.msra.mxu0 %v622
        %681 = vmatpush.bf16.msra.mxu0 %v621
        %682 = vmatmul.bf16.gmra.mxu0 %v672
        %v683 = vpop.f32.mrf.mxu0
        %v684 = vadd.f32 0.0, %v683
        %v685 = vpop.f32.mrf.mxu0
        %v686 = vadd.f32 0.0, %v685
        %687 = vdwg.mxu0
        %v688 = vrcp.pop %v665
        %v689 = vmul.f32 %v684, %v688
        %v690 = vmul.f32 %v686, %v688
        %s691 = sld [smem:[#allocation2]]
        %v692 = vstv %s691
        %v693 = vmul.f32 %v692, %v689
        %v694 = vmul.f32 %v692, %v690
        %v695 = vadd.f32 %v317, %v693
        %v696 = vadd.f32 %v318, %v694
        %697 = vst [vmem:[%s297] sm:$0xff] %v695
        %698 = vst [vmem:[%s297 + $0x8] sm:$0xff] %v696
        %s699 = sand.u32 %s186, 1
        %s700 = scalar_lea.sflag [#allocation4], %s699
        %s701 = sand.u32 %s186, 1
        %s702 = smul.addr %s701, 16
        %s703 = scalar_lea.vmem [#allocation3], %s702
        // Predicated region
        $region45: #{tpu_custom_call.1} parent=43 // pred_check
          %p704 = pneg %p196
        $region46: #{tpu_custom_call.1} parent=43 // pred_check_branch
          %706 = sbr.rel (%p704) target = $region48
        $region47: #{tpu_custom_call.1} parent=43 // pred_region
          %708 = vsyncadd %s700, 0
          %s709 = smul.addr %s25, 2
          %s710 = sadd.s32 %s26, %s709
          %s711 = smul.addr %s710, 8
          %s712 = scalar_lea.hbm %s6, %s711
          %s713 = sshll.u32 %s703, 4
          %s714 = int_to_ptr.vmem [resolvable:$true] %s713
          %s715 = sshll.u32 %s712, 4
          %s716 = int_to_ptr.hbm [resolvable:$true] %s715
          %721 = dma.vmem_to_hbm [thread:$0]  %s714, 256, %s716, %s700, 128, 128, 8
        $region48: #{tpu_custom_call.1} parent=43 // pred_fallthru
          _
      $region44: #{tpu_custom_call.1} parent=5 // pred_fallthru
        _
      %p722 = scmp.le.s32.totalorder 2, %s16
      // Predicated region
      $region49: #{tpu_custom_call.1} parent=5 // pred_check
        %p723 = pneg %p722
      $region50: #{tpu_custom_call.1} parent=5 // pred_check_branch
        %725 = sbr.rel (%p723) target = $region52
      $region51: #{tpu_custom_call.1} parent=5 // pred_region
        %s726 = ssub.s32 %s16, 2
        // Predicated region
        $region53: #{tpu_custom_call.1} parent=51 // pred_check
          %p727 = pneg %p202
        $region54: #{tpu_custom_call.1} parent=51 // pred_check_branch
          %729 = sbr.rel (%p727) target = $region56
        $region55: #{tpu_custom_call.1} parent=51 // pred_region
          %s730 = sand.u32 %s187, 1
          %s731 = scalar_lea.sflag [#allocation4], %s730
          %s732 = sand.u32 %s187, 1
          %s733 = smul.addr %s732, 16
          %s734 = scalar_lea.vmem [#allocation3], %s733
          %736 = dma.done %s731, 256
        $region56: #{tpu_custom_call.1} parent=51 // pred_fallthru
          _
      $region52: #{tpu_custom_call.1} parent=5 // pred_fallthru
        _
    $region6: #{tpu_custom_call.1} parent=1 // loop_footer
      %s20 = sadd.s32 1, %s16
    $region7: #{tpu_custom_call.1} parent=1 // loop_footer_branch
      %15 = sbr.rel target = $region3
    $region8: #{tpu_custom_call.1} parent=1 // loop_exit
      _
    %737 = vsyncpa [#allocation4], 1
    %s738 = scalar_lea.sflag [#allocation4], 1
    %739 = vsyncpa %s738, 1

</llo_original>
